<compile_context>
chip_gen: v5e
topology: v5e:2x2
jax: 0.10.0
libtpu: 0.0.40
codegen_flags: <defaults>
</compile_context>

<pallas_src>
import functools

import jax
import jax.numpy as jnp
import numpy as np
from jax.experimental import pallas as pl
from jax.experimental.pallas import tpu as pltpu


def _silu(v):
    return v * jax.nn.sigmoid(v)


# --------------------------------- kernel ------------------------------------
def _mixer_kernel(x_ref, win_ref, wout_ref, pp_ref, tri_ref, tmask_ref, o_ref,
                  *, n_tokens, seqs_per_step, mm_dtype):
    """One grid step = `seqs_per_step` sequences folded to an (M = Bb*N, C) slab."""
    N, Bb = n_tokens, seqs_per_step
    x = x_ref[...]                                         # (M, C) f32
    M, C = x.shape

    # ---- in_proj (Linear, no bias): (M, C) @ (C, 2C), split into u / z ------
    xz = jnp.dot(x.astype(mm_dtype), win_ref[...],
                 preferred_element_type=jnp.float32)       # (M, 2C) f32
    u = xz[:, :C]
    z = xz[:, C:]

    # ---- depthwise causal conv1d (kernel=3, left pad 2) ---------------------
    # Shifts on the XLU via pltpu.roll; rows that would wrap across a sequence
    # boundary are zeroed by wrapper-precomputed 0/1 masks (no iota/mod here).
    m1 = tmask_ref[:, 0:1]                                 # (M, 1): 1.0 where t >= 1
    m2 = tmask_ref[:, 1:2]                                 # (M, 1): 1.0 where t >= 2
    u_m1 = pltpu.roll(u, shift=1, axis=0) * m1             # u[t-1]
    u_m2 = pltpu.roll(u, shift=2, axis=0) * m2             # u[t-2]
    pp = pp_ref[...]                                       # (8, C) packed params
    uc = pp[0:1, :] * u_m2 + pp[1:2, :] * u_m1 + pp[2:3, :] * u + pp[3:4, :]
    uc = _silu(uc)
    zs = _silu(z)

    # ---- simple SSM (exact for time-invariant B/C) --------------------------
    #   h_t = sum_{t'<=t} u_{t'} (x) B ;  y_t = <h_t, C> + u_t * D
    #     => y = cumsum_t(u) * sum_s(B*C) + u * D          (per sequence)
    # Per-sequence cumsum with a single (N, N) lower-triangular matrix on MXU.
    tri = tri_ref[...]                                     # (N, N)
    uc_mm = uc.astype(mm_dtype)
    if Bb == 1:
        cum = jnp.dot(tri, uc_mm, preferred_element_type=jnp.float32)
    else:
        cum = jnp.einsum(
            'bnm,bmc->bnc',
            jnp.broadcast_to(tri, (Bb, N, N)),
            uc_mm.reshape(Bb, N, C),
            preferred_element_type=jnp.float32).reshape(M, C)
    ssm = cum * pp[4:5, :] + uc * pp[5:6, :]               # rows: bc, D

    # ---- gate + out_proj -----------------------------------------------------
    gated = ssm * zs
    o_ref[...] = jnp.dot(gated.astype(mm_dtype), wout_ref[...],
                         preferred_element_type=jnp.float32).astype(o_ref.dtype)


# --------------------------------- wrapper ------------------------------------
def _default_batch_per_step(B, N, max_rows=1024):
    """Largest divisor Bb of B with >= 2 grid steps (v7x megacore) and Bb*N <= max_rows."""
    best = 1
    for bb in range(1, B + 1):
        if B % bb:
            continue
        if bb * N > max_rows:
            break
        if B // bb >= 2 or B == 1:
            best = bb
    return best


def hsi_mamba_vision_mixer(x, params, *, batch_per_step=None,
                           matmul_dtype=jnp.float32):
    B, N, C = x.shape
    Bb = _default_batch_per_step(B, N) if batch_per_step is None else batch_per_step
    assert B % Bb == 0, "batch must be divisible by batch_per_step"
    M = Bb * N

    f32 = jnp.float32
    # (N, N) per-sequence lower-triangular cumsum matrix (NOT block-diag (M, M)).
    r = np.arange(N)
    tri = jnp.asarray((r[:, None] >= r[None, :]).astype(np.float32)).astype(matmul_dtype)

    # Grid-invariant per-token 0/1 conv-boundary masks, precomputed once.
    t_in = np.arange(M) % N
    tmask = jnp.asarray(
        np.stack([t_in >= 1, t_in >= 2], axis=1).astype(np.float32))      # (M, 2)

    # Packed per-channel params (8, C): conv taps (t-2, t-1, t), conv bias,
    # bc[d] = sum_s B[d,s]*C[d,s] (folds the SSM state dim away), D, zero pad.
    bc = jnp.sum(params["B"] * params["C"], axis=-1)
    pp = jnp.zeros((8, C), f32)
    pp = pp.at[0:3, :].set(params["conv_w"].astype(f32))
    pp = pp.at[3, :].set(params["conv_b"].astype(f32))
    pp = pp.at[4, :].set(bc.astype(f32))
    pp = pp.at[5, :].set(params["D"].astype(f32))

    win = params["win_t"].astype(matmul_dtype)
    wout = params["wout_t"].astype(matmul_dtype)

    weights = [win, wout, pp, tri, tmask]
    # TODO(synk): mark these grid-invariant streams pipeline_mode=pl.Buffered(1)
    # once single-buffered BlockSpecs are validated on the target jax release.
    wspecs = [pl.BlockSpec(w.shape, lambda i, nd=w.ndim: (0,) * nd) for w in weights]

    x2 = x.reshape(B * N, C)                     # fold (B, N, C) -> (B*N, C)
    out2 = pl.pallas_call(
        functools.partial(_mixer_kernel, n_tokens=N, seqs_per_step=Bb,
                          mm_dtype=matmul_dtype),
        out_shape=jax.ShapeDtypeStruct((B * N, C), x.dtype),
        grid=(B // Bb,),
        in_specs=[pl.BlockSpec((M, C), lambda i: (i, 0))] + wspecs,
        out_specs=pl.BlockSpec((M, C), lambda i: (i, 0)),
        compiler_params=pltpu.CompilerParams(dimension_semantics=("parallel",)),
    )(x2, *weights)
    return out2.reshape(B, N, C)


# ----------------------- deterministic parameter init ------------------------
def init_params(key, dim, d_state=8, d_conv=3):
    ks = jax.random.split(key, 6)
    f = jnp.float32
    p = {}
    # in_proj: Linear(dim, 2*dim, bias=False); torch weight (2*dim, dim) -> W.T
    p["win_t"] = (jax.random.normal(ks[0], (2 * dim, dim), f) * 0.05).T
    # depthwise Conv1d weight (dim, 1, d_conv) -> (d_conv, dim) taps in time order
    conv_w = jax.random.normal(ks[1], (dim, 1, d_conv), f) * 0.2
    p["conv_w"] = conv_w[:, 0, :].T
    p["conv_b"] = jax.random.normal(ks[2], (dim,), f) * 0.02
    # SSM params, torch shape (d_inner, d_state).  A and x_proj are defined by
    # the PyTorch module but never used in forward(), so they are omitted.
    p["B"] = jax.random.normal(ks[3], (dim, d_state), f) * 0.1
    p["C"] = jax.random.normal(ks[4], (dim, d_state), f) * 0.1
    p["D"] = jnp.ones((dim,), f)
    # out_proj: Linear(dim, dim, bias=False) -> W.T
    p["wout_t"] = (jax.random.normal(ks[5], (dim, dim), f) * 0.05).T
    return p


# ---------------------------- pure-JAX reference -----------------------------
def reference(x, p):
    """Faithful translation of SimpleMambaLayer.forward (sequential SSM scan)."""
    Bsz, N, C = x.shape
    xz = x @ p["win_t"]
    u, z = xz[..., :C], xz[..., C:]
    up = jnp.pad(u, ((0, 0), (2, 0), (0, 0)))                 # causal left pad 2
    cw = p["conv_w"]
    uc = cw[0] * up[:, :N] + cw[1] * up[:, 1:N + 1] + cw[2] * up[:, 2:N + 2] \
        + p["conv_b"]
    uc = jax.nn.silu(uc)
    zs = jax.nn.silu(z)

    Bp, Cp = p["B"], p["C"]                                    # (C, d_state)

    def step(h, ut):                                           # ut: (Bsz, C)
        h = h + ut[:, :, None] * Bp[None]
        y = jnp.sum(h * Cp[None], axis=-1) + ut * p["D"]
        return h, y

    h0 = jnp.zeros((Bsz, C, Bp.shape[1]), jnp.float32)
    _, ys = jax.lax.scan(step, h0, jnp.transpose(uc, (1, 0, 2)))
    ssm = jnp.transpose(ys, (1, 0, 2))
    return (ssm * zs) @ p["wout_t"]


# ---------------------------------- main --------------------------------------
if __name__ == "__main__":
    key = jax.random.PRNGKey(0)
    k_x, k_p = jax.random.split(key)

    Bsz, N, dim = 2, 64, 32                     # (batch, tokens, d_model)
    x = jax.random.normal(k_x, (Bsz, N, dim), jnp.float32)
    params = init_params(k_p, dim)

    # Default sizing -> Bb = 1, grid = (2,)  (>= 2 steps for v7x megacore).
    out = jax.block_until_ready(hsi_mamba_vision_mixer(x, params))
    ref = jax.block_until_ready(reference(x, params))

    assert out.shape == (Bsz, N, dim)
    max_err = float(jnp.max(jnp.abs(out - ref)))
    assert jnp.allclose(out, ref, atol=1e-3, rtol=1e-3), max_err
    print("KERNEL_OK")
</pallas_src>

<mosaic_0001>
module attributes {stable_mosaic.version = 11 : i64} {
  func.func @_mixer_kernel(%arg0: i32, %arg1: memref<64x32xf32, #tpu.memory_space<vmem>>, %arg2: memref<32x64xf32, #tpu.memory_space<vmem>>, %arg3: memref<32x32xf32, #tpu.memory_space<vmem>>, %arg4: memref<8x32xf32, #tpu.memory_space<vmem>>, %arg5: memref<64x64xf32, #tpu.memory_space<vmem>>, %arg6: memref<64x2xf32, #tpu.memory_space<vmem>>, %arg7: memref<64x32xf32, #tpu.memory_space<vmem>>) attributes {dimension_semantics = [#tpu.dimension_semantics<parallel>], iteration_bounds = array<i64: 2>, scalar_prefetch = 0 : i64, scratch_operands = 0 : i64, tpu.core_type = #tpu.core_type<tc>, window_params = [{transform_indices = @transform_0, window_bounds = array<i64: 64, 32>}, {pipeline_mode = #tpu.pipeline_mode<synchronous>, transform_indices = @transform_1, window_bounds = array<i64: 32, 64>}, {pipeline_mode = #tpu.pipeline_mode<synchronous>, transform_indices = @transform_2, window_bounds = array<i64: 32, 32>}, {pipeline_mode = #tpu.pipeline_mode<synchronous>, transform_indices = @transform_3, window_bounds = array<i64: 8, 32>}, {pipeline_mode = #tpu.pipeline_mode<synchronous>, transform_indices = @transform_4, window_bounds = array<i64: 64, 64>}, {pipeline_mode = #tpu.pipeline_mode<synchronous>, transform_indices = @transform_5, window_bounds = array<i64: 64, 2>}, {transform_indices = @transform_6, window_bounds = array<i64: 64, 32>}]} {
    %c0 = arith.constant 0 : index
    %c0_0 = arith.constant 0 : index
    %0 = vector.load %arg1[%c0, %c0_0] : memref<64x32xf32, #tpu.memory_space<vmem>>, vector<64x32xf32>
    %c0_1 = arith.constant 0 : index
    %c0_2 = arith.constant 0 : index
    %1 = vector.load %arg2[%c0_1, %c0_2] : memref<32x64xf32, #tpu.memory_space<vmem>>, vector<32x64xf32>
    %cst = arith.constant dense<0.000000e+00> : vector<64x64xf32>
    %2 = tpu.matmul %0, %1, %cst {dimension_numbers = #tpu.dot_dimension_numbers<[1], [0], [0], [1], [0, 0, 1, 1], [], []>} : vector<64x32xf32>, vector<32x64xf32>, vector<64x64xf32> -> vector<64x64xf32>
    %3 = vector.extract_strided_slice %2 {offsets = [0, 0], sizes = [64, 32], strides = [1, 1]} : vector<64x64xf32> to vector<64x32xf32>
    %4 = vector.extract_strided_slice %2 {offsets = [0, 32], sizes = [64, 32], strides = [1, 1]} : vector<64x64xf32> to vector<64x32xf32>
    %c0_3 = arith.constant 0 : index
    %c0_4 = arith.constant 0 : index
    %5 = vector.load %arg6[%c0_3, %c0_4] : memref<64x2xf32, #tpu.memory_space<vmem>>, vector<64x1xf32>
    %c0_5 = arith.constant 0 : index
    %c1 = arith.constant 1 : index
    %6 = vector.load %arg6[%c0_5, %c1] : memref<64x2xf32, #tpu.memory_space<vmem>>, vector<64x1xf32>
    %c1_i32 = arith.constant 1 : i32
    %7 = tpu.dynamic_rotate %3 by %c1_i32 dim 0 : vector<64x32xf32>, i32 -> vector<64x32xf32>
    %8 = vector.broadcast %5 : vector<64x1xf32> to vector<64x32xf32>
    %9 = arith.mulf %7, %8 : vector<64x32xf32>
    %c2_i32 = arith.constant 2 : i32
    %10 = tpu.dynamic_rotate %3 by %c2_i32 dim 0 : vector<64x32xf32>, i32 -> vector<64x32xf32>
    %11 = vector.broadcast %6 : vector<64x1xf32> to vector<64x32xf32>
    %12 = arith.mulf %10, %11 : vector<64x32xf32>
    %c0_6 = arith.constant 0 : index
    %c0_7 = arith.constant 0 : index
    %13 = vector.load %arg4[%c0_6, %c0_7] : memref<8x32xf32, #tpu.memory_space<vmem>>, vector<8x32xf32>
    %14 = vector.extract_strided_slice %13 {offsets = [0, 0], sizes = [1, 32], strides = [1, 1]} : vector<8x32xf32> to vector<1x32xf32>
    %15 = vector.broadcast %14 : vector<1x32xf32> to vector<64x32xf32>
    %16 = arith.mulf %15, %12 : vector<64x32xf32>
    %17 = vector.extract_strided_slice %13 {offsets = [1, 0], sizes = [1, 32], strides = [1, 1]} : vector<8x32xf32> to vector<1x32xf32>
    %18 = vector.broadcast %17 : vector<1x32xf32> to vector<64x32xf32>
    %19 = arith.mulf %18, %9 : vector<64x32xf32>
    %20 = arith.addf %16, %19 : vector<64x32xf32>
    %21 = vector.extract_strided_slice %13 {offsets = [2, 0], sizes = [1, 32], strides = [1, 1]} : vector<8x32xf32> to vector<1x32xf32>
    %22 = vector.broadcast %21 : vector<1x32xf32> to vector<64x32xf32>
    %23 = arith.mulf %22, %3 : vector<64x32xf32>
    %24 = arith.addf %20, %23 : vector<64x32xf32>
    %25 = vector.extract_strided_slice %13 {offsets = [3, 0], sizes = [1, 32], strides = [1, 1]} : vector<8x32xf32> to vector<1x32xf32>
    %26 = vector.broadcast %25 : vector<1x32xf32> to vector<64x32xf32>
    %27 = arith.addf %24, %26 : vector<64x32xf32>
    %28 = arith.negf %27 : vector<64x32xf32>
    %29 = math.exp %28 : vector<64x32xf32>
    %cst_8 = arith.constant 1.000000e+00 : f32
    %30 = vector.broadcast %cst_8 : f32 to vector<64x32xf32>
    %31 = arith.addf %30, %29 : vector<64x32xf32>
    %32 = arith.divf %30, %31 : vector<64x32xf32>
    %33 = arith.mulf %27, %32 : vector<64x32xf32>
    %34 = arith.negf %4 : vector<64x32xf32>
    %35 = math.exp %34 : vector<64x32xf32>
    %cst_9 = arith.constant 1.000000e+00 : f32
    %36 = vector.broadcast %cst_9 : f32 to vector<64x32xf32>
    %37 = arith.addf %36, %35 : vector<64x32xf32>
    %38 = arith.divf %36, %37 : vector<64x32xf32>
    %39 = arith.mulf %4, %38 : vector<64x32xf32>
    %c0_10 = arith.constant 0 : index
    %c0_11 = arith.constant 0 : index
    %40 = vector.load %arg5[%c0_10, %c0_11] : memref<64x64xf32, #tpu.memory_space<vmem>>, vector<64x64xf32>
    %cst_12 = arith.constant dense<0.000000e+00> : vector<64x32xf32>
    %41 = tpu.matmul %40, %33, %cst_12 {dimension_numbers = #tpu.dot_dimension_numbers<[1], [0], [0], [1], [0, 0, 1, 1], [], []>} : vector<64x64xf32>, vector<64x32xf32>, vector<64x32xf32> -> vector<64x32xf32>
    %42 = vector.extract_strided_slice %13 {offsets = [4, 0], sizes = [1, 32], strides = [1, 1]} : vector<8x32xf32> to vector<1x32xf32>
    %43 = vector.broadcast %42 : vector<1x32xf32> to vector<64x32xf32>
    %44 = arith.mulf %41, %43 : vector<64x32xf32>
    %45 = vector.extract_strided_slice %13 {offsets = [5, 0], sizes = [1, 32], strides = [1, 1]} : vector<8x32xf32> to vector<1x32xf32>
    %46 = vector.broadcast %45 : vector<1x32xf32> to vector<64x32xf32>
    %47 = arith.mulf %33, %46 : vector<64x32xf32>
    %48 = arith.addf %44, %47 : vector<64x32xf32>
    %49 = arith.mulf %48, %39 : vector<64x32xf32>
    %c0_13 = arith.constant 0 : index
    %c0_14 = arith.constant 0 : index
    %50 = vector.load %arg3[%c0_13, %c0_14] : memref<32x32xf32, #tpu.memory_space<vmem>>, vector<32x32xf32>
    %cst_15 = arith.constant dense<0.000000e+00> : vector<64x32xf32>
    %51 = tpu.matmul %49, %50, %cst_15 {dimension_numbers = #tpu.dot_dimension_numbers<[1], [0], [0], [1], [0, 0, 1, 1], [], []>} : vector<64x32xf32>, vector<32x32xf32>, vector<64x32xf32> -> vector<64x32xf32>
    %c0_16 = arith.constant 0 : index
    %c0_17 = arith.constant 0 : index
    %52 = vector.load %arg7[%c0_16, %c0_17] : memref<64x32xf32, #tpu.memory_space<vmem>>, vector<64x32xf32>
    tpu.vector_store %arg7[%c0_16, %c0_17], %51 {strides = array<i32>} : memref<64x32xf32, #tpu.memory_space<vmem>>, vector<64x32xf32>,
    return
  }
  func.func @transform_0(%arg0: i32) -> (i32, i32) {
    %c0_i32 = arith.constant 0 : i32
    %c0_i32_0 = arith.constant 0 : i32
    return %arg0, %c0_i32 : i32, i32
  }
  func.func @transform_1(%arg0: i32) -> (i32, i32) {
    %c0_i32 = arith.constant 0 : i32
    %c0_i32_0 = arith.constant 0 : i32
    %c0_i32_1 = arith.constant 0 : i32
    return %c0_i32, %c0_i32_0 : i32, i32
  }
  func.func @transform_2(%arg0: i32) -> (i32, i32) {
    %c0_i32 = arith.constant 0 : i32
    %c0_i32_0 = arith.constant 0 : i32
    %c0_i32_1 = arith.constant 0 : i32
    return %c0_i32, %c0_i32_0 : i32, i32
  }
  func.func @transform_3(%arg0: i32) -> (i32, i32) {
    %c0_i32 = arith.constant 0 : i32
    %c0_i32_0 = arith.constant 0 : i32
    %c0_i32_1 = arith.constant 0 : i32
    return %c0_i32, %c0_i32_0 : i32, i32
  }
  func.func @transform_4(%arg0: i32) -> (i32, i32) {
    %c0_i32 = arith.constant 0 : i32
    %c0_i32_0 = arith.constant 0 : i32
    %c0_i32_1 = arith.constant 0 : i32
    return %c0_i32, %c0_i32_0 : i32, i32
  }
  func.func @transform_5(%arg0: i32) -> (i32, i32) {
    %c0_i32 = arith.constant 0 : i32
    %c0_i32_0 = arith.constant 0 : i32
    %c0_i32_1 = arith.constant 0 : i32
    return %c0_i32, %c0_i32_0 : i32, i32
  }
  func.func @transform_6(%arg0: i32) -> (i32, i32) {
    %c0_i32 = arith.constant 0 : i32
    %c0_i32_0 = arith.constant 0 : i32
    return %arg0, %c0_i32 : i32, i32
  }
}

</mosaic_0001>

<llo_original>
// kernel: tpu_custom_call.1
$region0: #{tpu_custom_call.1}
  #allocation0 [shape = 'u32[]', space=smem, size = 0x4, offset = 0x4, fixed_abs, tag = 'smem constant byte address 0x4 - core index']
  #allocation1 [shape = 'u32[72,128]{1,0:T(1,128)}', space=vmem, size = 0x9000, scoped, tag = 'internal scratch']
  %s0 = inlined_call_operand.vmem [shape: f32[128,32], index: 0, kind: input, shape index: {}]
  %s1 = inlined_call_operand.vmem [shape: f32[32,64], index: 1, kind: input, shape index: {}]
  %s2 = inlined_call_operand.vmem [shape: f32[32,32], index: 2, kind: input, shape index: {}]
  %s3 = inlined_call_operand.vmem [shape: f32[8,32], index: 3, kind: input, shape index: {}]
  %s4 = inlined_call_operand.vmem [shape: f32[64,64], index: 4, kind: input, shape index: {}]
  %s5 = inlined_call_operand.vmem [shape: f32[64,2], index: 5, kind: input, shape index: {}]
  %s6 = inlined_call_operand.vmem [shape: f32[128,32], index: 6, kind: output, shape index: {}]
  %s7 = sld [smem:[#allocation0]]
  $region57: #{tpu_custom_call.1} parent=0
    _
  %s9 = ssub.s32 1, %s7
  %s10 = scalar_select 0, %s9, %s7
  loop: start=0, step=1, limit=4
  $region2: #{tpu_custom_call.1} parent=0 // loop_pre_header
    _
  $region3: #{tpu_custom_call.1} parent=0 // loop_header
    %s12 = sphi 0, %s16
    %p13 = scmp.ge.s32.totalorder %s12, 4
    %s22 = sphi 0, %s24
    %s25 = sphi 0, %s22
    %s26 = sphi 0, %s25
    %s42 = sphi 0, %s26
    %s46 = sphi 0, %s46
    %s48 = sphi 0, %s46
    %s49 = sphi 0, %s48
    %s63 = sphi 0, %s49
    %s67 = sphi 0, %s67
    %s69 = sphi 0, %s67
    %s70 = sphi 0, %s69
    %s84 = sphi 0, %s70
    %s88 = sphi 0, %s88
    %s90 = sphi 0, %s88
    %s91 = sphi 0, %s90
    %s105 = sphi 0, %s91
    %s109 = sphi 0, %s109
    %s111 = sphi 0, %s109
    %s112 = sphi 0, %s111
    %s126 = sphi 0, %s112
    %s130 = sphi 0, %s130
    %s132 = sphi 0, %s130
    %s133 = sphi 0, %s132
    %s147 = sphi 0, %s133
    %s153 = sphi 0, %s155
    %s156 = sphi 0, %s153
    %s157 = sphi 0, %s156
    %s173 = sphi 0, %s157
  $region4: #{tpu_custom_call.1} parent=0 // loop_header_branch
    %15 = sbr.rel (%p13) target = $region8
  $region5: #{tpu_custom_call.1} parent=0 // loop_body
    %s17 = ssub.s32 %s12, 1
    %s18 = ssub.s32 %s12, 2
    %s19 = sadd.s32 %s12, 1
    %s20 = ssub.s32 %s12, %s19
    %p21 = scmp.eq.s32.totalorder %s20, 0
    %s23 = sadd.s32 %s22, 1
    %s24 = scalar_select %p21, %s22, %s23
    %p27 = pneg %p21
    %p28 = scmp.eq.s32.totalorder %s12, 1
    %p29 = por %p27, %p28
    %p30 = scmp.ne.s32.totalorder %s22, %s25
    %p31 = scmp.eq.s32.totalorder %s12, 0
    %p32 = por %p30, %p31
    %p33 = scmp.ne.s32.totalorder %s22, %s25
    %p34 = scmp.eq.s32.totalorder %s17, 1
    %p35 = por %p33, %p34
    %p36 = scmp.ne.s32.totalorder %s25, %s26
    %p37 = scmp.eq.s32.totalorder %s17, 0
    %p38 = por %p36, %p37
    %p39 = scmp.ne.s32.totalorder %s25, %s26
    %p40 = scmp.eq.s32.totalorder %s18, 1
    %p41 = por %p39, %p40
    %p43 = scmp.ne.s32.totalorder %s26, %s42
    %p44 = scmp.eq.s32.totalorder %s18, 0
    %p45 = por %p43, %p44
    %s47 = sadd.s32 %s46, 1
    %p50 = scmp.eq.s32.totalorder %s12, 1
    %p51 = scmp.ne.s32.totalorder %s46, %s48
    %p52 = scmp.eq.s32.totalorder %s12, 0
    %p53 = por %p51, %p52
    %p54 = scmp.ne.s32.totalorder %s46, %s48
    %p55 = scmp.eq.s32.totalorder %s17, 1
    %p56 = por %p54, %p55
    %p57 = scmp.ne.s32.totalorder %s48, %s49
    %p58 = scmp.eq.s32.totalorder %s17, 0
    %p59 = por %p57, %p58
    %p60 = scmp.ne.s32.totalorder %s48, %s49
    %p61 = scmp.eq.s32.totalorder %s18, 1
    %p62 = por %p60, %p61
    %p64 = scmp.ne.s32.totalorder %s49, %s63
    %p65 = scmp.eq.s32.totalorder %s18, 0
    %p66 = por %p64, %p65
    %s68 = sadd.s32 %s67, 1
    %p71 = scmp.eq.s32.totalorder %s12, 1
    %p72 = scmp.ne.s32.totalorder %s67, %s69
    %p73 = scmp.eq.s32.totalorder %s12, 0
    %p74 = por %p72, %p73
    %p75 = scmp.ne.s32.totalorder %s67, %s69
    %p76 = scmp.eq.s32.totalorder %s17, 1
    %p77 = por %p75, %p76
    %p78 = scmp.ne.s32.totalorder %s69, %s70
    %p79 = scmp.eq.s32.totalorder %s17, 0
    %p80 = por %p78, %p79
    %p81 = scmp.ne.s32.totalorder %s69, %s70
    %p82 = scmp.eq.s32.totalorder %s18, 1
    %p83 = por %p81, %p82
    %p85 = scmp.ne.s32.totalorder %s70, %s84
    %p86 = scmp.eq.s32.totalorder %s18, 0
    %p87 = por %p85, %p86
    %s89 = sadd.s32 %s88, 1
    %p92 = scmp.eq.s32.totalorder %s12, 1
    %p93 = scmp.ne.s32.totalorder %s88, %s90
    %p94 = scmp.eq.s32.totalorder %s12, 0
    %p95 = por %p93, %p94
    %p96 = scmp.ne.s32.totalorder %s88, %s90
    %p97 = scmp.eq.s32.totalorder %s17, 1
    %p98 = por %p96, %p97
    %p99 = scmp.ne.s32.totalorder %s90, %s91
    %p100 = scmp.eq.s32.totalorder %s17, 0
    %p101 = por %p99, %p100
    %p102 = scmp.ne.s32.totalorder %s90, %s91
    %p103 = scmp.eq.s32.totalorder %s18, 1
    %p104 = por %p102, %p103
    %p106 = scmp.ne.s32.totalorder %s91, %s105
    %p107 = scmp.eq.s32.totalorder %s18, 0
    %p108 = por %p106, %p107
    %s110 = sadd.s32 %s109, 1
    %p113 = scmp.eq.s32.totalorder %s12, 1
    %p114 = scmp.ne.s32.totalorder %s109, %s111
    %p115 = scmp.eq.s32.totalorder %s12, 0
    %p116 = por %p114, %p115
    %p117 = scmp.ne.s32.totalorder %s109, %s111
    %p118 = scmp.eq.s32.totalorder %s17, 1
    %p119 = por %p117, %p118
    %p120 = scmp.ne.s32.totalorder %s111, %s112
    %p121 = scmp.eq.s32.totalorder %s17, 0
    %p122 = por %p120, %p121
    %p123 = scmp.ne.s32.totalorder %s111, %s112
    %p124 = scmp.eq.s32.totalorder %s18, 1
    %p125 = por %p123, %p124
    %p127 = scmp.ne.s32.totalorder %s112, %s126
    %p128 = scmp.eq.s32.totalorder %s18, 0
    %p129 = por %p127, %p128
    %s131 = sadd.s32 %s130, 1
    %p134 = scmp.eq.s32.totalorder %s12, 1
    %p135 = scmp.ne.s32.totalorder %s130, %s132
    %p136 = scmp.eq.s32.totalorder %s12, 0
    %p137 = por %p135, %p136
    %p138 = scmp.ne.s32.totalorder %s130, %s132
    %p139 = scmp.eq.s32.totalorder %s17, 1
    %p140 = por %p138, %p139
    %p141 = scmp.ne.s32.totalorder %s132, %s133
    %p142 = scmp.eq.s32.totalorder %s17, 0
    %p143 = por %p141, %p142
    %p144 = scmp.ne.s32.totalorder %s132, %s133
    %p145 = scmp.eq.s32.totalorder %s18, 1
    %p146 = por %p144, %p145
    %p148 = scmp.ne.s32.totalorder %s133, %s147
    %p149 = scmp.eq.s32.totalorder %s18, 0
    %p150 = por %p148, %p149
    %s151 = ssub.s32 %s12, %s19
    %p152 = scmp.eq.s32.totalorder %s151, 0
    %s154 = sadd.s32 %s153, 1
    %s155 = scalar_select %p152, %s153, %s154
    %p158 = pneg %p152
    %p159 = scmp.eq.s32.totalorder %s12, 1
    %p160 = por %p158, %p159
    %p161 = scmp.ne.s32.totalorder %s153, %s156
    %p162 = scmp.eq.s32.totalorder %s12, 0
    %p163 = por %p161, %p162
    %p164 = scmp.ne.s32.totalorder %s153, %s156
    %p165 = scmp.eq.s32.totalorder %s17, 1
    %p166 = por %p164, %p165
    %p167 = scmp.ne.s32.totalorder %s156, %s157
    %p168 = scmp.eq.s32.totalorder %s17, 0
    %p169 = por %p167, %p168
    %p170 = scmp.ne.s32.totalorder %s156, %s157
    %p171 = scmp.eq.s32.totalorder %s18, 1
    %p172 = por %p170, %p171
    %p174 = scmp.ne.s32.totalorder %s157, %s173
    %p175 = scmp.eq.s32.totalorder %s18, 0
    %p176 = por %p174, %p175
    %p177 = scmp.le.s32.totalorder 1, %s12
    %p178 = scmp.lt.s32.totalorder %s12, 3
    %p179 = pnand %p177, %p178
    %p180 = pneg %p179
    // Predicated region
    $region9: #{tpu_custom_call.1} parent=5 // pred_check
      _
    $region10: #{tpu_custom_call.1} parent=5 // pred_check_branch
      %182 = sbr.rel (%p179) target = $region12
    $region11: #{tpu_custom_call.1} parent=5 // pred_region
      %s183 = ssub.s32 %s12, 1
      // Predicated region
      $region13: #{tpu_custom_call.1} parent=11 // pred_check
        %p184 = pneg %p59
      $region14: #{tpu_custom_call.1} parent=11 // pred_check_branch
        %186 = sbr.rel (%p184) target = $region16
      $region15: #{tpu_custom_call.1} parent=11 // pred_region
        _
      $region16: #{tpu_custom_call.1} parent=11 // pred_fallthru
        _
      // Predicated region
      $region17: #{tpu_custom_call.1} parent=11 // pred_check
        %p187 = pneg %p80
      $region18: #{tpu_custom_call.1} parent=11 // pred_check_branch
        %189 = sbr.rel (%p187) target = $region20
      $region19: #{tpu_custom_call.1} parent=11 // pred_region
        _
      $region20: #{tpu_custom_call.1} parent=11 // pred_fallthru
        _
      // Predicated region
      $region21: #{tpu_custom_call.1} parent=11 // pred_check
        %p190 = pneg %p101
      $region22: #{tpu_custom_call.1} parent=11 // pred_check_branch
        %192 = sbr.rel (%p190) target = $region24
      $region23: #{tpu_custom_call.1} parent=11 // pred_region
        _
      $region24: #{tpu_custom_call.1} parent=11 // pred_fallthru
        _
      // Predicated region
      $region25: #{tpu_custom_call.1} parent=11 // pred_check
        %p193 = pneg %p122
      $region26: #{tpu_custom_call.1} parent=11 // pred_check_branch
        %195 = sbr.rel (%p193) target = $region28
      $region27: #{tpu_custom_call.1} parent=11 // pred_region
        _
      $region28: #{tpu_custom_call.1} parent=11 // pred_fallthru
        _
      // Predicated region
      $region29: #{tpu_custom_call.1} parent=11 // pred_check
        %p196 = pneg %p143
      $region30: #{tpu_custom_call.1} parent=11 // pred_check_branch
        %198 = sbr.rel (%p196) target = $region32
      $region31: #{tpu_custom_call.1} parent=11 // pred_region
        _
      $region32: #{tpu_custom_call.1} parent=11 // pred_fallthru
        _
    $region12: #{tpu_custom_call.1} parent=5 // pred_fallthru
      _
    %p199 = scmp.lt.s32.totalorder %s12, 2
    // Predicated region
    $region33: #{tpu_custom_call.1} parent=5 // pred_check
      %p200 = pneg %p199
    $region34: #{tpu_custom_call.1} parent=5 // pred_check_branch
      %202 = sbr.rel (%p200) target = $region36
    $region35: #{tpu_custom_call.1} parent=5 // pred_region
      // Predicated region
      $region37: #{tpu_custom_call.1} parent=35 // pred_check
        %p203 = pneg %p32
      $region38: #{tpu_custom_call.1} parent=35 // pred_check_branch
        %205 = sbr.rel (%p203) target = $region40
      $region39: #{tpu_custom_call.1} parent=35 // pred_region
        %s206 = smul.u32 8, %s12
        %p207 = scmp.lt.s32.totalorder %s206, 15
        %s208 = scalar_select %p207, %s206, 15
        %s209 = smul.addr %s208, 8
        %s210 = scalar_lea.vmem %s0, %s209
        %s211 = smul.u32 8, %s12
      $region40: #{tpu_custom_call.1} parent=35 // pred_fallthru
        _
    $region36: #{tpu_custom_call.1} parent=5 // pred_fallthru
      _
    %p212 = scmp.le.s32.totalorder 1, %s12
    %p213 = scmp.lt.s32.totalorder %s12, 3
    %p214 = pnand %p212, %p213
    %p215 = pneg %p214
    // Predicated region
    $region41: #{tpu_custom_call.1} parent=5 // pred_check
      _
    $region42: #{tpu_custom_call.1} parent=5 // pred_check_branch
      %217 = sbr.rel (%p214) target = $region44
    $region43: #{tpu_custom_call.1} parent=5 // pred_region
      %s218 = ssub.s32 %s12, 1
      %s219 = smul.u32 8, %s17
      %p220 = scmp.lt.s32.totalorder %s219, 15
      %s221 = scalar_select %p220, %s219, 15
      %s222 = smul.addr %s221, 8
      %s223 = scalar_lea.vmem %s0, %s222
      %p224 = pneg %p38
      %p225 = pneg %p35
      %p226 = pneg %p59
      %p227 = pneg %p56
      %p228 = pneg %p80
      %p229 = pneg %p77
      %p230 = pneg %p101
      %p231 = pneg %p98
      %p232 = pneg %p122
      %p233 = pneg %p119
      %p234 = pneg %p143
      %p235 = pneg %p140
      %p236 = pneg %p169
      %p237 = pneg %p166
      %s238 = smul.u32 8, %s17
      %p239 = scmp.lt.s32.totalorder %s238, 15
      %s240 = scalar_select %p239, %s238, 15
      %s241 = smul.addr %s240, 8
      %s242 = scalar_lea.vmem %s6, %s241
      %s243 = smul.u32 8, %s17
      %p244 = scmp.lt.s32.totalorder %s243, 15
      %s245 = scalar_select %p244, %s243, 15
      %s246 = smul.addr %s245, 8
      %s247 = scalar_lea.vmem %s0, %s246
      %s248 = smul.u32 8, %s17
      %s249 = smul.u32 8, %s17
      %p250 = scmp.lt.s32.totalorder %s249, 15
      %s251 = scalar_select %p250, %s249, 15
      %s252 = smul.addr %s251, 8
      %s253 = scalar_lea.vmem %s6, %s252
      %s254 = smul.u32 8, %s17
      %v255 = vld [vmem:[%s247] sm:$0xff]
      %v256 = vld [vmem:[%s247 + $0x8] sm:$0xff]
      %v257 = vld [vmem:[%s247 + $0x10] sm:$0xff]
      %v258 = vld [vmem:[%s247 + $0x18] sm:$0xff]
      %v259 = vld [vmem:[%s247 + $0x20] sm:$0xff]
      %v260 = vld [vmem:[%s247 + $0x28] sm:$0xff]
      %v261 = vld [vmem:[%s247 + $0x30] sm:$0xff]
      %v262 = vld [vmem:[%s247 + $0x38] sm:$0xff]
      %v263 = vld [vmem:[%s1] sm:$0xff]
      %v264 = vld [vmem:[%s1 + $0x8] sm:$0xff]
      %v265 = vld [vmem:[%s1 + $0x10] sm:$0xff]
      %v266 = vld [vmem:[%s1 + $0x18] sm:$0xff]
      %vm267 = vcmask 261120
      %v269 = vsel %vm267, %v255, 0
      %v272 = vsel %vm267, %v256, 0
      %v275 = vsel %vm267, %v257, 0
      %v278 = vsel %vm267, %v258, 0
      %v281 = vsel %vm267, %v259, 0
      %v284 = vsel %vm267, %v260, 0
      %v287 = vsel %vm267, %v261, 0
      %v290 = vsel %vm267, %v262, 0
      %292 = vmatpush.msra.mxu0 0.0
      %293 = vmatpush.msra.mxu0 0.0
      %294 = vmatpush.msra.mxu0 0.0
      %295 = vmatpush.msra.mxu0 0.0
      %296 = vmatpush.msra.mxu0 0.0
      %297 = vmatpush.msra.mxu0 0.0
      %298 = vmatpush.msra.mxu0 0.0
      %299 = vmatpush.msra.mxu0 0.0
      %300 = vmatpush.msra.mxu0 0.0
      %301 = vmatpush.msra.mxu0 0.0
      %302 = vmatpush.msra.mxu0 0.0
      %303 = vmatpush.msra.mxu0 0.0
      %304 = vmatpush.msra.mxu0 %v266
      %305 = vmatpush.msra.mxu0 %v265
      %306 = vmatpush.msra.mxu0 %v264
      %307 = vmatpush.msra.mxu0 %v263
      %308 = vmatmul.f32.gmra.mxu0 %v269
      %v309 = vpop.f32.mrf.mxu0
      %v310 = vadd.f32 0.0, %v309
      %311 = vmatmul.f32.gmra.mxu0 %v272
      %v312 = vpop.f32.mrf.mxu0
      %v313 = vadd.f32 0.0, %v312
      %314 = vmatmul.f32.gmra.mxu0 %v275
      %v315 = vpop.f32.mrf.mxu0
      %v316 = vadd.f32 0.0, %v315
      %317 = vmatmul.f32.gmra.mxu0 %v278
      %v318 = vpop.f32.mrf.mxu0
      %v319 = vadd.f32 0.0, %v318
      %320 = vmatmul.f32.gmra.mxu0 %v281
      %v321 = vpop.f32.mrf.mxu0
      %v322 = vadd.f32 0.0, %v321
      %323 = vmatmul.f32.gmra.mxu0 %v284
      %v324 = vpop.f32.mrf.mxu0
      %v325 = vadd.f32 0.0, %v324
      %326 = vmatmul.f32.gmra.mxu0 %v287
      %v327 = vpop.f32.mrf.mxu0
      %v328 = vadd.f32 0.0, %v327
      %329 = vmatmul.f32.gmra.mxu0 %v290
      %v330 = vpop.f32.mrf.mxu0
      %v331 = vadd.f32 0.0, %v330
      %332 = vdwg.mxu0
      %v333 = vld [vmem:[%s5] sm:$0xff]
      %v334 = vld [vmem:[%s5 + $0x8] sm:$0xff]
      %v335 = vld [vmem:[%s5 + $0x10] sm:$0xff]
      %v336 = vld [vmem:[%s5 + $0x18] sm:$0xff]
      %v337 = vld [vmem:[%s5 + $0x20] sm:$0xff]
      %v338 = vld [vmem:[%s5 + $0x28] sm:$0xff]
      %v339 = vld [vmem:[%s5 + $0x30] sm:$0xff]
      %v340 = vld [vmem:[%s5 + $0x38] sm:$0xff]
      %v341 = vrot.slane %v310, 7
      %v342 = vrot.slane %v313, 7
      %v343 = vrot.slane %v316, 7
      %v344 = vrot.slane %v319, 7
      %v345 = vrot.slane %v322, 7
      %v346 = vrot.slane %v325, 7
      %v347 = vrot.slane %v328, 7
      %v348 = vrot.slane %v331, 7
      %v349 = vlaneseq
      %v350 = vshrl.u32 %v349, 7
      %vm351 = vcmp.lt.s32.totalorder %v350, 1
      %v352 = vsel %vm351, %v347, %v348
      %v353 = vsel %vm351, %v346, %v347
      %v354 = vsel %vm351, %v345, %v346
      %v355 = vsel %vm351, %v344, %v345
      %v356 = vsel %vm351, %v343, %v344
      %v357 = vsel %vm351, %v342, %v343
      %v358 = vsel %vm351, %v341, %v342
      %v359 = vsel %vm351, %v348, %v341
      %361 = vset.pattern.permute.xlu0 0
      %362 = vperm.xlu0 %361, %v333
      %v363 = vpop.permute.xlu0 %362
      %366 = vset.pattern.permute.xlu0 0
      %367 = vperm.xlu0 %366, %v334
      %v368 = vpop.permute.xlu0 %367
      %371 = vset.pattern.permute.xlu0 0
      %372 = vperm.xlu0 %371, %v335
      %v373 = vpop.permute.xlu0 %372
      %376 = vset.pattern.permute.xlu0 0
      %377 = vperm.xlu0 %376, %v336
      %v378 = vpop.permute.xlu0 %377
      %381 = vset.pattern.permute.xlu0 0
      %382 = vperm.xlu0 %381, %v337
      %v383 = vpop.permute.xlu0 %382
      %386 = vset.pattern.permute.xlu0 0
      %387 = vperm.xlu0 %386, %v338
      %v388 = vpop.permute.xlu0 %387
      %391 = vset.pattern.permute.xlu0 0
      %392 = vperm.xlu0 %391, %v339
      %v393 = vpop.permute.xlu0 %392
      %396 = vset.pattern.permute.xlu0 0
      %397 = vperm.xlu0 %396, %v340
      %v398 = vpop.permute.xlu0 %397
      %v400 = vmul.f32 %v359, %v363
      %v401 = vmul.f32 %v358, %v368
      %v402 = vmul.f32 %v357, %v373
      %v403 = vmul.f32 %v356, %v378
      %v404 = vmul.f32 %v355, %v383
      %v405 = vmul.f32 %v354, %v388
      %v406 = vmul.f32 %v353, %v393
      %v407 = vmul.f32 %v352, %v398
      %v408 = vrot.slane %v310, 6
      %v409 = vrot.slane %v313, 6
      %v410 = vrot.slane %v316, 6
      %v411 = vrot.slane %v319, 6
      %v412 = vrot.slane %v322, 6
      %v413 = vrot.slane %v325, 6
      %v414 = vrot.slane %v328, 6
      %v415 = vrot.slane %v331, 6
      %vm416 = vcmp.lt.s32.totalorder %v350, 2
      %v417 = vsel %vm416, %v414, %v415
      %v418 = vsel %vm416, %v413, %v414
      %v419 = vsel %vm416, %v412, %v413
      %v420 = vsel %vm416, %v411, %v412
      %v421 = vsel %vm416, %v410, %v411
      %v422 = vsel %vm416, %v409, %v410
      %v423 = vsel %vm416, %v408, %v409
      %v424 = vsel %vm416, %v415, %v408
      %425 = vset.pattern.permute.xlu0 1
      %426 = vperm.xlu0 %425, %v333
      %v427 = vpop.permute.xlu0 %426
      %429 = vset.pattern.permute.xlu0 1
      %430 = vperm.xlu0 %429, %v334
      %v431 = vpop.permute.xlu0 %430
      %433 = vset.pattern.permute.xlu0 1
      %434 = vperm.xlu0 %433, %v335
      %v435 = vpop.permute.xlu0 %434
      %437 = vset.pattern.permute.xlu0 1
      %438 = vperm.xlu0 %437, %v336
      %v439 = vpop.permute.xlu0 %438
      %441 = vset.pattern.permute.xlu0 1
      %442 = vperm.xlu0 %441, %v337
      %v443 = vpop.permute.xlu0 %442
      %445 = vset.pattern.permute.xlu0 1
      %446 = vperm.xlu0 %445, %v338
      %v447 = vpop.permute.xlu0 %446
      %449 = vset.pattern.permute.xlu0 1
      %450 = vperm.xlu0 %449, %v339
      %v451 = vpop.permute.xlu0 %450
      %453 = vset.pattern.permute.xlu0 1
      %454 = vperm.xlu0 %453, %v340
      %v455 = vpop.permute.xlu0 %454
      %v457 = vmul.f32 %v424, %v427
      %v458 = vmul.f32 %v423, %v431
      %v459 = vmul.f32 %v422, %v435
      %v460 = vmul.f32 %v421, %v439
      %v461 = vmul.f32 %v420, %v443
      %v462 = vmul.f32 %v419, %v447
      %v463 = vmul.f32 %v418, %v451
      %v464 = vmul.f32 %v417, %v455
      %v465 = vld [vmem:[%s3] sm:$0xff]
      %v466 = vperm.slane %v465, 0
      %v467 = vmul.f32 %v466, %v457
      %v468 = vmul.f32 %v466, %v458
      %v469 = vmul.f32 %v466, %v459
      %v470 = vmul.f32 %v466, %v460
      %v471 = vmul.f32 %v466, %v461
      %v472 = vmul.f32 %v466, %v462
      %v473 = vmul.f32 %v466, %v463
      %v474 = vmul.f32 %v466, %v464
      %v475 = vperm.slane %v465, 1
      %v476 = vmul.f32 %v475, %v400
      %v477 = vmul.f32 %v475, %v401
      %v478 = vmul.f32 %v475, %v402
      %v479 = vmul.f32 %v475, %v403
      %v480 = vmul.f32 %v475, %v404
      %v481 = vmul.f32 %v475, %v405
      %v482 = vmul.f32 %v475, %v406
      %v483 = vmul.f32 %v475, %v407
      %v484 = vadd.f32 %v467, %v476
      %v485 = vadd.f32 %v468, %v477
      %v486 = vadd.f32 %v469, %v478
      %v487 = vadd.f32 %v470, %v479
      %v488 = vadd.f32 %v471, %v480
      %v489 = vadd.f32 %v472, %v481
      %v490 = vadd.f32 %v473, %v482
      %v491 = vadd.f32 %v474, %v483
      %v492 = vperm.slane %v465, 2
      %v493 = vmul.f32 %v492, %v310
      %v494 = vmul.f32 %v492, %v313
      %v495 = vmul.f32 %v492, %v316
      %v496 = vmul.f32 %v492, %v319
      %v497 = vmul.f32 %v492, %v322
      %v498 = vmul.f32 %v492, %v325
      %v499 = vmul.f32 %v492, %v328
      %v500 = vmul.f32 %v492, %v331
      %v501 = vadd.f32 %v484, %v493
      %v502 = vadd.f32 %v485, %v494
      %v503 = vadd.f32 %v486, %v495
      %v504 = vadd.f32 %v487, %v496
      %v505 = vadd.f32 %v488, %v497
      %v506 = vadd.f32 %v489, %v498
      %v507 = vadd.f32 %v490, %v499
      %v508 = vadd.f32 %v491, %v500
      %v509 = vperm.slane %v465, 3
      %v510 = vadd.f32 %v501, %v509
      %v511 = vadd.f32 %v502, %v509
      %v512 = vadd.f32 %v503, %v509
      %v513 = vadd.f32 %v504, %v509
      %v514 = vadd.f32 %v505, %v509
      %v515 = vadd.f32 %v506, %v509
      %v516 = vadd.f32 %v507, %v509
      %v517 = vadd.f32 %v508, %v509
      %v518 = vxor.u32 %v510, 2147483648
      %v519 = vxor.u32 %v511, 2147483648
      %v520 = vxor.u32 %v512, 2147483648
      %v521 = vxor.u32 %v513, 2147483648
      %v522 = vxor.u32 %v514, 2147483648
      %v523 = vxor.u32 %v515, 2147483648
      %v524 = vxor.u32 %v516, 2147483648
      %v525 = vxor.u32 %v517, 2147483648
      %v526 = vmul.f32 %v518, 1.442695
      %v527 = vpow.pop %v526
      %v528 = vmul.f32 %v519, 1.442695
      %v529 = vpow.pop %v528
      %v530 = vmul.f32 %v520, 1.442695
      %v531 = vpow.pop %v530
      %v532 = vmul.f32 %v521, 1.442695
      %v533 = vpow.pop %v532
      %v534 = vmul.f32 %v522, 1.442695
      %v535 = vpow.pop %v534
      %v536 = vmul.f32 %v523, 1.442695
      %v537 = vpow.pop %v536
      %v538 = vmul.f32 %v524, 1.442695
      %v539 = vpow.pop %v538
      %v540 = vmul.f32 %v525, 1.442695
      %v541 = vpow.pop %v540
      %v542 = vadd.f32 %v527, 1.0
      %v543 = vadd.f32 %v529, 1.0
      %v544 = vadd.f32 %v531, 1.0
      %v545 = vadd.f32 %v533, 1.0
      %v546 = vadd.f32 %v535, 1.0
      %v547 = vadd.f32 %v537, 1.0
      %v548 = vadd.f32 %v539, 1.0
      %v549 = vadd.f32 %v541, 1.0
      %v550 = vrcp.pop %v542
      %v551 = vmul.f32 %v542, %v550
      %v552 = vsub.f32 1.0, %v551
      %v553 = vmul.f32 %v550, %v552
      %v554 = vadd.f32 %v550, %v553
      %vm555 = vweird.f32 %v542
      %vm556 = vweird.f32 %v550
      %vm557 = vmor %vm555, %vm556
      %v558 = vsel %vm557, %v550, %v554
      %v559 = vand.u32 2147483647, %v542
      %vm560 = vcmp.eq.f32.partialorder %v559, 8.507059e+37
      %v561 = vand.u32 %v542, 2147483648
      %v562 = vor.u32 1.1754944e-38, %v561
      %v563 = vsel %vm560, %v562, %v558
      %v564 = vmul.f32 1.0, %v563
      %v565 = vrcp.pop %v543
      %v566 = vmul.f32 %v543, %v565
      %v567 = vsub.f32 1.0, %v566
      %v568 = vmul.f32 %v565, %v567
      %v569 = vadd.f32 %v565, %v568
      %vm570 = vweird.f32 %v543
      %vm571 = vweird.f32 %v565
      %vm572 = vmor %vm570, %vm571
      %v573 = vsel %vm572, %v565, %v569
      %v574 = vand.u32 2147483647, %v543
      %vm575 = vcmp.eq.f32.partialorder %v574, 8.507059e+37
      %v576 = vand.u32 %v543, 2147483648
      %v577 = vor.u32 1.1754944e-38, %v576
      %v578 = vsel %vm575, %v577, %v573
      %v579 = vmul.f32 1.0, %v578
      %v580 = vrcp.pop %v544
      %v581 = vmul.f32 %v544, %v580
      %v582 = vsub.f32 1.0, %v581
      %v583 = vmul.f32 %v580, %v582
      %v584 = vadd.f32 %v580, %v583
      %vm585 = vweird.f32 %v544
      %vm586 = vweird.f32 %v580
      %vm587 = vmor %vm585, %vm586
      %v588 = vsel %vm587, %v580, %v584
      %v589 = vand.u32 2147483647, %v544
      %vm590 = vcmp.eq.f32.partialorder %v589, 8.507059e+37
      %v591 = vand.u32 %v544, 2147483648
      %v592 = vor.u32 1.1754944e-38, %v591
      %v593 = vsel %vm590, %v592, %v588
      %v594 = vmul.f32 1.0, %v593
      %v595 = vrcp.pop %v545
      %v596 = vmul.f32 %v545, %v595
      %v597 = vsub.f32 1.0, %v596
      %v598 = vmul.f32 %v595, %v597
      %v599 = vadd.f32 %v595, %v598
      %vm600 = vweird.f32 %v545
      %vm601 = vweird.f32 %v595
      %vm602 = vmor %vm600, %vm601
      %v603 = vsel %vm602, %v595, %v599
      %v604 = vand.u32 2147483647, %v545
      %vm605 = vcmp.eq.f32.partialorder %v604, 8.507059e+37
      %v606 = vand.u32 %v545, 2147483648
      %v607 = vor.u32 1.1754944e-38, %v606
      %v608 = vsel %vm605, %v607, %v603
      %v609 = vmul.f32 1.0, %v608
      %v610 = vrcp.pop %v546
      %v611 = vmul.f32 %v546, %v610
      %v612 = vsub.f32 1.0, %v611
      %v613 = vmul.f32 %v610, %v612
      %v614 = vadd.f32 %v610, %v613
      %vm615 = vweird.f32 %v546
      %vm616 = vweird.f32 %v610
      %vm617 = vmor %vm615, %vm616
      %v618 = vsel %vm617, %v610, %v614
      %v619 = vand.u32 2147483647, %v546
      %vm620 = vcmp.eq.f32.partialorder %v619, 8.507059e+37
      %v621 = vand.u32 %v546, 2147483648
      %v622 = vor.u32 1.1754944e-38, %v621
      %v623 = vsel %vm620, %v622, %v618
      %v624 = vmul.f32 1.0, %v623
      %v625 = vrcp.pop %v547
      %v626 = vmul.f32 %v547, %v625
      %v627 = vsub.f32 1.0, %v626
      %v628 = vmul.f32 %v625, %v627
      %v629 = vadd.f32 %v625, %v628
      %vm630 = vweird.f32 %v547
      %vm631 = vweird.f32 %v625
      %vm632 = vmor %vm630, %vm631
      %v633 = vsel %vm632, %v625, %v629
      %v634 = vand.u32 2147483647, %v547
      %vm635 = vcmp.eq.f32.partialorder %v634, 8.507059e+37
      %v636 = vand.u32 %v547, 2147483648
      %v637 = vor.u32 1.1754944e-38, %v636
      %v638 = vsel %vm635, %v637, %v633
      %v639 = vmul.f32 1.0, %v638
      %v640 = vrcp.pop %v548
      %v641 = vmul.f32 %v548, %v640
      %v642 = vsub.f32 1.0, %v641
      %v643 = vmul.f32 %v640, %v642
      %v644 = vadd.f32 %v640, %v643
      %vm645 = vweird.f32 %v548
      %vm646 = vweird.f32 %v640
      %vm647 = vmor %vm645, %vm646
      %v648 = vsel %vm647, %v640, %v644
      %v649 = vand.u32 2147483647, %v548
      %vm650 = vcmp.eq.f32.partialorder %v649, 8.507059e+37
      %v651 = vand.u32 %v548, 2147483648
      %v652 = vor.u32 1.1754944e-38, %v651
      %v653 = vsel %vm650, %v652, %v648
      %v654 = vmul.f32 1.0, %v653
      %v655 = vrcp.pop %v549
      %v656 = vmul.f32 %v549, %v655
      %v657 = vsub.f32 1.0, %v656
      %v658 = vmul.f32 %v655, %v657
      %v659 = vadd.f32 %v655, %v658
      %vm660 = vweird.f32 %v549
      %vm661 = vweird.f32 %v655
      %vm662 = vmor %vm660, %vm661
      %v663 = vsel %vm662, %v655, %v659
      %v664 = vand.u32 2147483647, %v549
      %vm665 = vcmp.eq.f32.partialorder %v664, 8.507059e+37
      %v666 = vand.u32 %v549, 2147483648
      %v667 = vor.u32 1.1754944e-38, %v666
      %v668 = vsel %vm665, %v667, %v663
      %v669 = vmul.f32 1.0, %v668
      %v670 = vmul.f32 %v510, %v564
      %v671 = vmul.f32 %v511, %v579
      %v672 = vmul.f32 %v512, %v594
      %v673 = vmul.f32 %v513, %v609
      %v674 = vmul.f32 %v514, %v624
      %v675 = vmul.f32 %v515, %v639
      %v676 = vmul.f32 %v516, %v654
      %v677 = vmul.f32 %v517, %v669
      %v678 = vxor.u32 %v310, 2147483648
      %v679 = vxor.u32 %v313, 2147483648
      %v680 = vxor.u32 %v316, 2147483648
      %v681 = vxor.u32 %v319, 2147483648
      %v682 = vxor.u32 %v322, 2147483648
      %v683 = vxor.u32 %v325, 2147483648
      %v684 = vxor.u32 %v328, 2147483648
      %v685 = vxor.u32 %v331, 2147483648
      %v686 = vmul.f32 %v678, 1.442695
      %v687 = vpow.pop %v686
      %v688 = vmul.f32 %v679, 1.442695
      %v689 = vpow.pop %v688
      %v690 = vmul.f32 %v680, 1.442695
      %v691 = vpow.pop %v690
      %v692 = vmul.f32 %v681, 1.442695
      %v693 = vpow.pop %v692
      %v694 = vmul.f32 %v682, 1.442695
      %v695 = vpow.pop %v694
      %v696 = vmul.f32 %v683, 1.442695
      %v697 = vpow.pop %v696
      %v698 = vmul.f32 %v684, 1.442695
      %v699 = vpow.pop %v698
      %v700 = vmul.f32 %v685, 1.442695
      %v701 = vpow.pop %v700
      %v702 = vadd.f32 %v687, 1.0
      %v703 = vadd.f32 %v689, 1.0
      %v704 = vadd.f32 %v691, 1.0
      %v705 = vadd.f32 %v693, 1.0
      %v706 = vadd.f32 %v695, 1.0
      %v707 = vadd.f32 %v697, 1.0
      %v708 = vadd.f32 %v699, 1.0
      %v709 = vadd.f32 %v701, 1.0
      %v710 = vrcp.pop %v702
      %v711 = vmul.f32 %v702, %v710
      %v712 = vsub.f32 1.0, %v711
      %v713 = vmul.f32 %v710, %v712
      %v714 = vadd.f32 %v710, %v713
      %vm715 = vweird.f32 %v702
      %vm716 = vweird.f32 %v710
      %vm717 = vmor %vm715, %vm716
      %v718 = vsel %vm717, %v710, %v714
      %v719 = vand.u32 2147483647, %v702
      %vm720 = vcmp.eq.f32.partialorder %v719, 8.507059e+37
      %v721 = vand.u32 %v702, 2147483648
      %v722 = vor.u32 1.1754944e-38, %v721
      %v723 = vsel %vm720, %v722, %v718
      %v724 = vmul.f32 1.0, %v723
      %v725 = vrcp.pop %v703
      %v726 = vmul.f32 %v703, %v725
      %v727 = vsub.f32 1.0, %v726
      %v728 = vmul.f32 %v725, %v727
      %v729 = vadd.f32 %v725, %v728
      %vm730 = vweird.f32 %v703
      %vm731 = vweird.f32 %v725
      %vm732 = vmor %vm730, %vm731
      %v733 = vsel %vm732, %v725, %v729
      %v734 = vand.u32 2147483647, %v703
      %vm735 = vcmp.eq.f32.partialorder %v734, 8.507059e+37
      %v736 = vand.u32 %v703, 2147483648
      %v737 = vor.u32 1.1754944e-38, %v736
      %v738 = vsel %vm735, %v737, %v733
      %v739 = vmul.f32 1.0, %v738
      %v740 = vrcp.pop %v704
      %v741 = vmul.f32 %v704, %v740
      %v742 = vsub.f32 1.0, %v741
      %v743 = vmul.f32 %v740, %v742
      %v744 = vadd.f32 %v740, %v743
      %vm745 = vweird.f32 %v704
      %vm746 = vweird.f32 %v740
      %vm747 = vmor %vm745, %vm746
      %v748 = vsel %vm747, %v740, %v744
      %v749 = vand.u32 2147483647, %v704
      %vm750 = vcmp.eq.f32.partialorder %v749, 8.507059e+37
      %v751 = vand.u32 %v704, 2147483648
      %v752 = vor.u32 1.1754944e-38, %v751
      %v753 = vsel %vm750, %v752, %v748
      %v754 = vmul.f32 1.0, %v753
      %v755 = vrcp.pop %v705
      %v756 = vmul.f32 %v705, %v755
      %v757 = vsub.f32 1.0, %v756
      %v758 = vmul.f32 %v755, %v757
      %v759 = vadd.f32 %v755, %v758
      %vm760 = vweird.f32 %v705
      %vm761 = vweird.f32 %v755
      %vm762 = vmor %vm760, %vm761
      %v763 = vsel %vm762, %v755, %v759
      %v764 = vand.u32 2147483647, %v705
      %vm765 = vcmp.eq.f32.partialorder %v764, 8.507059e+37
      %v766 = vand.u32 %v705, 2147483648
      %v767 = vor.u32 1.1754944e-38, %v766
      %v768 = vsel %vm765, %v767, %v763
      %v769 = vmul.f32 1.0, %v768
      %v770 = vrcp.pop %v706
      %v771 = vmul.f32 %v706, %v770
      %v772 = vsub.f32 1.0, %v771
      %v773 = vmul.f32 %v770, %v772
      %v774 = vadd.f32 %v770, %v773
      %vm775 = vweird.f32 %v706
      %vm776 = vweird.f32 %v770
      %vm777 = vmor %vm775, %vm776
      %v778 = vsel %vm777, %v770, %v774
      %v779 = vand.u32 2147483647, %v706
      %vm780 = vcmp.eq.f32.partialorder %v779, 8.507059e+37
      %v781 = vand.u32 %v706, 2147483648
      %v782 = vor.u32 1.1754944e-38, %v781
      %v783 = vsel %vm780, %v782, %v778
      %v784 = vmul.f32 1.0, %v783
      %v785 = vrcp.pop %v707
      %v786 = vmul.f32 %v707, %v785
      %v787 = vsub.f32 1.0, %v786
      %v788 = vmul.f32 %v785, %v787
      %v789 = vadd.f32 %v785, %v788
      %vm790 = vweird.f32 %v707
      %vm791 = vweird.f32 %v785
      %vm792 = vmor %vm790, %vm791
      %v793 = vsel %vm792, %v785, %v789
      %v794 = vand.u32 2147483647, %v707
      %vm795 = vcmp.eq.f32.partialorder %v794, 8.507059e+37
      %v796 = vand.u32 %v707, 2147483648
      %v797 = vor.u32 1.1754944e-38, %v796
      %v798 = vsel %vm795, %v797, %v793
      %v799 = vmul.f32 1.0, %v798
      %v800 = vrcp.pop %v708
      %v801 = vmul.f32 %v708, %v800
      %v802 = vsub.f32 1.0, %v801
      %v803 = vmul.f32 %v800, %v802
      %v804 = vadd.f32 %v800, %v803
      %vm805 = vweird.f32 %v708
      %vm806 = vweird.f32 %v800
      %vm807 = vmor %vm805, %vm806
      %v808 = vsel %vm807, %v800, %v804
      %v809 = vand.u32 2147483647, %v708
      %vm810 = vcmp.eq.f32.partialorder %v809, 8.507059e+37
      %v811 = vand.u32 %v708, 2147483648
      %v812 = vor.u32 1.1754944e-38, %v811
      %v813 = vsel %vm810, %v812, %v808
      %v814 = vmul.f32 1.0, %v813
      %v815 = vrcp.pop %v709
      %v816 = vmul.f32 %v709, %v815
      %v817 = vsub.f32 1.0, %v816
      %v818 = vmul.f32 %v815, %v817
      %v819 = vadd.f32 %v815, %v818
      %vm820 = vweird.f32 %v709
      %vm821 = vweird.f32 %v815
      %vm822 = vmor %vm820, %vm821
      %v823 = vsel %vm822, %v815, %v819
      %v824 = vand.u32 2147483647, %v709
      %vm825 = vcmp.eq.f32.partialorder %v824, 8.507059e+37
      %v826 = vand.u32 %v709, 2147483648
      %v827 = vor.u32 1.1754944e-38, %v826
      %v828 = vsel %vm825, %v827, %v823
      %v829 = vmul.f32 1.0, %v828
      %v830 = vmul.f32 %v310, %v724
      %v831 = vmul.f32 %v313, %v739
      %v832 = vmul.f32 %v316, %v754
      %v833 = vmul.f32 %v319, %v769
      %v834 = vmul.f32 %v322, %v784
      %v835 = vmul.f32 %v325, %v799
      %v836 = vmul.f32 %v328, %v814
      %v837 = vmul.f32 %v331, %v829
      %v838 = vld [vmem:[%s4] sm:$0xff]
      %v839 = vld [vmem:[%s4 + $0x8] sm:$0xff]
      %v840 = vld [vmem:[%s4 + $0x10] sm:$0xff]
      %v841 = vld [vmem:[%s4 + $0x18] sm:$0xff]
      %v842 = vld [vmem:[%s4 + $0x20] sm:$0xff]
      %v843 = vld [vmem:[%s4 + $0x28] sm:$0xff]
      %v844 = vld [vmem:[%s4 + $0x30] sm:$0xff]
      %v845 = vld [vmem:[%s4 + $0x38] sm:$0xff]
      %vm846 = vcmask 523264
      %v848 = vsel %vm846, %v838, 0
      %v851 = vsel %vm846, %v839, 0
      %v854 = vsel %vm846, %v840, 0
      %v857 = vsel %vm846, %v841, 0
      %v860 = vsel %vm846, %v842, 0
      %v863 = vsel %vm846, %v843, 0
      %v866 = vsel %vm846, %v844, 0
      %v869 = vsel %vm846, %v845, 0
      %871 = vmatpush.msra.mxu0 0.0
      %872 = vmatpush.msra.mxu0 0.0
      %873 = vmatpush.msra.mxu0 0.0
      %874 = vmatpush.msra.mxu0 0.0
      %875 = vmatpush.msra.mxu0 0.0
      %876 = vmatpush.msra.mxu0 0.0
      %877 = vmatpush.msra.mxu0 0.0
      %878 = vmatpush.msra.mxu0 0.0
      %879 = vmatpush.msra.mxu0 %v677
      %880 = vmatpush.msra.mxu0 %v676
      %881 = vmatpush.msra.mxu0 %v675
      %882 = vmatpush.msra.mxu0 %v674
      %883 = vmatpush.msra.mxu0 %v673
      %884 = vmatpush.msra.mxu0 %v672
      %885 = vmatpush.msra.mxu0 %v671
      %886 = vmatpush.msra.mxu0 %v670
      %887 = vmatmul.f32.gmra.mxu0 %v848
      %v888 = vpop.f32.mrf.mxu0
      %v889 = vadd.f32 0.0, %v888
      %890 = vmatmul.f32.gmra.mxu0 %v851
      %v891 = vpop.f32.mrf.mxu0
      %v892 = vadd.f32 0.0, %v891
      %893 = vmatmul.f32.gmra.mxu0 %v854
      %v894 = vpop.f32.mrf.mxu0
      %v895 = vadd.f32 0.0, %v894
      %896 = vmatmul.f32.gmra.mxu0 %v857
      %v897 = vpop.f32.mrf.mxu0
      %v898 = vadd.f32 0.0, %v897
      %899 = vmatmul.f32.gmra.mxu0 %v860
      %v900 = vpop.f32.mrf.mxu0
      %v901 = vadd.f32 0.0, %v900
      %902 = vmatmul.f32.gmra.mxu0 %v863
      %v903 = vpop.f32.mrf.mxu0
      %v904 = vadd.f32 0.0, %v903
      %905 = vmatmul.f32.gmra.mxu0 %v866
      %v906 = vpop.f32.mrf.mxu0
      %v907 = vadd.f32 0.0, %v906
      %908 = vmatmul.f32.gmra.mxu0 %v869
      %v909 = vpop.f32.mrf.mxu0
      %v910 = vadd.f32 0.0, %v909
      %911 = vdwg.mxu0
      %v912 = vperm.slane %v465, 4
      %v913 = vmul.f32 %v889, %v912
      %v914 = vmul.f32 %v892, %v912
      %v915 = vmul.f32 %v895, %v912
      %v916 = vmul.f32 %v898, %v912
      %v917 = vmul.f32 %v901, %v912
      %v918 = vmul.f32 %v904, %v912
      %v919 = vmul.f32 %v907, %v912
      %v920 = vmul.f32 %v910, %v912
      %v921 = vperm.slane %v465, 5
      %v922 = vmul.f32 %v670, %v921
      %v923 = vmul.f32 %v671, %v921
      %v924 = vmul.f32 %v672, %v921
      %v925 = vmul.f32 %v673, %v921
      %v926 = vmul.f32 %v674, %v921
      %v927 = vmul.f32 %v675, %v921
      %v928 = vmul.f32 %v676, %v921
      %v929 = vmul.f32 %v677, %v921
      %v930 = vadd.f32 %v913, %v922
      %v931 = vadd.f32 %v914, %v923
      %v932 = vadd.f32 %v915, %v924
      %v933 = vadd.f32 %v916, %v925
      %v934 = vadd.f32 %v917, %v926
      %v935 = vadd.f32 %v918, %v927
      %v936 = vadd.f32 %v919, %v928
      %v937 = vadd.f32 %v920, %v929
      %946 = vrot.lane.b32.xlu0 %v830, 96
      %v947 = vpop.permute.xlu0 %946
      %948 = vrot.lane.b32.xlu0 %v831, 96
      %v949 = vpop.permute.xlu0 %948
      %950 = vrot.lane.b32.xlu0 %v832, 96
      %v951 = vpop.permute.xlu0 %950
      %952 = vrot.lane.b32.xlu0 %v833, 96
      %v953 = vpop.permute.xlu0 %952
      %954 = vrot.lane.b32.xlu0 %v834, 96
      %v955 = vpop.permute.xlu0 %954
      %956 = vrot.lane.b32.xlu0 %v835, 96
      %v957 = vpop.permute.xlu0 %956
      %958 = vrot.lane.b32.xlu0 %v836, 96
      %v959 = vpop.permute.xlu0 %958
      %960 = vrot.lane.b32.xlu0 %v837, 96
      %v961 = vpop.permute.xlu0 %960
      %v970 = vmul.f32 %v930, %v947
      %v971 = vmul.f32 %v931, %v949
      %v972 = vmul.f32 %v932, %v951
      %v973 = vmul.f32 %v933, %v953
      %v974 = vmul.f32 %v934, %v955
      %v975 = vmul.f32 %v935, %v957
      %v976 = vmul.f32 %v936, %v959
      %v977 = vmul.f32 %v937, %v961
      %v978 = vld [vmem:[%s2] sm:$0xff]
      %v979 = vld [vmem:[%s2 + $0x8] sm:$0xff]
      %v980 = vld [vmem:[%s2 + $0x10] sm:$0xff]
      %v981 = vld [vmem:[%s2 + $0x18] sm:$0xff]
      %v983 = vsel %vm267, %v970, 0
      %v986 = vsel %vm267, %v971, 0
      %v989 = vsel %vm267, %v972, 0
      %v992 = vsel %vm267, %v973, 0
      %v995 = vsel %vm267, %v974, 0
      %v998 = vsel %vm267, %v975, 0
      %v1001 = vsel %vm267, %v976, 0
      %v1004 = vsel %vm267, %v977, 0
      %1006 = vmatpush.msra.mxu0 0.0
      %1007 = vmatpush.msra.mxu0 0.0
      %1008 = vmatpush.msra.mxu0 0.0
      %1009 = vmatpush.msra.mxu0 0.0
      %1010 = vmatpush.msra.mxu0 0.0
      %1011 = vmatpush.msra.mxu0 0.0
      %1012 = vmatpush.msra.mxu0 0.0
      %1013 = vmatpush.msra.mxu0 0.0
      %1014 = vmatpush.msra.mxu0 0.0
      %1015 = vmatpush.msra.mxu0 0.0
      %1016 = vmatpush.msra.mxu0 0.0
      %1017 = vmatpush.msra.mxu0 0.0
      %1018 = vmatpush.msra.mxu0 %v981
      %1019 = vmatpush.msra.mxu0 %v980
      %1020 = vmatpush.msra.mxu0 %v979
      %1021 = vmatpush.msra.mxu0 %v978
      %1022 = vmatmul.f32.gmra.mxu0 %v983
      %v1023 = vpop.f32.mrf.mxu0
      %v1024 = vadd.f32 0.0, %v1023
      %1025 = vmatmul.f32.gmra.mxu0 %v986
      %v1026 = vpop.f32.mrf.mxu0
      %v1027 = vadd.f32 0.0, %v1026
      %1028 = vmatmul.f32.gmra.mxu0 %v989
      %v1029 = vpop.f32.mrf.mxu0
      %v1030 = vadd.f32 0.0, %v1029
      %1031 = vmatmul.f32.gmra.mxu0 %v992
      %v1032 = vpop.f32.mrf.mxu0
      %v1033 = vadd.f32 0.0, %v1032
      %1034 = vmatmul.f32.gmra.mxu0 %v995
      %v1035 = vpop.f32.mrf.mxu0
      %v1036 = vadd.f32 0.0, %v1035
      %1037 = vmatmul.f32.gmra.mxu0 %v998
      %v1038 = vpop.f32.mrf.mxu0
      %v1039 = vadd.f32 0.0, %v1038
      %1040 = vmatmul.f32.gmra.mxu0 %v1001
      %v1041 = vpop.f32.mrf.mxu0
      %v1042 = vadd.f32 0.0, %v1041
      %1043 = vmatmul.f32.gmra.mxu0 %v1004
      %v1044 = vpop.f32.mrf.mxu0
      %v1045 = vadd.f32 0.0, %v1044
      %1046 = vdwg.mxu0
      %1047 = vst.msk [vmem:[%s253] sm:$0xff] %vm267, %v1024
      %1048 = vst.msk [vmem:[%s253 + $0x8] sm:$0xff] %vm267, %v1027
      %1049 = vst.msk [vmem:[%s253 + $0x10] sm:$0xff] %vm267, %v1030
      %1050 = vst.msk [vmem:[%s253 + $0x18] sm:$0xff] %vm267, %v1033
      %1051 = vst.msk [vmem:[%s253 + $0x20] sm:$0xff] %vm267, %v1036
      %1052 = vst.msk [vmem:[%s253 + $0x28] sm:$0xff] %vm267, %v1039
      %1053 = vst.msk [vmem:[%s253 + $0x30] sm:$0xff] %vm267, %v1042
      %1054 = vst.msk [vmem:[%s253 + $0x38] sm:$0xff] %vm267, %v1045
      %s1055 = smul.u32 8, %s17
      %p1056 = scmp.lt.s32.totalorder %s1055, 15
      %s1057 = scalar_select %p1056, %s1055, 15
      %s1058 = smul.addr %s1057, 8
      %s1059 = scalar_lea.vmem %s6, %s1058
      // Predicated region
      $region45: #{tpu_custom_call.1} parent=43 // pred_check
        %p1060 = pneg %p166
      $region46: #{tpu_custom_call.1} parent=43 // pred_check_branch
        %1062 = sbr.rel (%p1060) target = $region48
      $region47: #{tpu_custom_call.1} parent=43 // pred_region
        %s1063 = smul.u32 8, %s17
      $region48: #{tpu_custom_call.1} parent=43 // pred_fallthru
        _
    $region44: #{tpu_custom_call.1} parent=5 // pred_fallthru
      _
    %p1064 = scmp.le.s32.totalorder 2, %s12
    // Predicated region
    $region49: #{tpu_custom_call.1} parent=5 // pred_check
      %p1065 = pneg %p1064
    $region50: #{tpu_custom_call.1} parent=5 // pred_check_branch
      %1067 = sbr.rel (%p1065) target = $region52
    $region51: #{tpu_custom_call.1} parent=5 // pred_region
      %s1068 = ssub.s32 %s12, 2
      // Predicated region
      $region53: #{tpu_custom_call.1} parent=51 // pred_check
        %p1069 = pneg %p172
      $region54: #{tpu_custom_call.1} parent=51 // pred_check_branch
        %1071 = sbr.rel (%p1069) target = $region56
      $region55: #{tpu_custom_call.1} parent=51 // pred_region
        %s1072 = smul.u32 8, %s18
        %p1073 = scmp.lt.s32.totalorder %s1072, 15
        %s1074 = scalar_select %p1073, %s1072, 15
        %s1075 = smul.addr %s1074, 8
        %s1076 = scalar_lea.vmem %s6, %s1075
      $region56: #{tpu_custom_call.1} parent=51 // pred_fallthru
        _
    $region52: #{tpu_custom_call.1} parent=5 // pred_fallthru
      _
  $region6: #{tpu_custom_call.1} parent=0 // loop_footer
    %s16 = sadd.s32 1, %s12
  $region7: #{tpu_custom_call.1} parent=0 // loop_footer_branch
    %11 = sbr.rel target = $region3
  $region8: #{tpu_custom_call.1} parent=0 // loop_exit
    _

</llo_original>
